<compile_context>
chip_gen: v5e
topology: v5e:2x2
jax: 0.10.0
libtpu: 0.0.40
codegen_flags: <defaults>
</compile_context>

<pallas_src>
import math
import functools

import jax
import jax.numpy as jnp
from jax import lax
from jax.experimental import pallas as pl
from jax.experimental.pallas import tpu as pltpu


def _round_up(a, b):
    return (a + b - 1) // b * b


def _linear_gn_relu_kernel(x_ref, w_ref, gpool_ref, gbcg_ref, beta_ref, o_ref, *, eps, act):
    tn = x_ref.shape[0]

    # Main matmul on the MXU; accumulate in f32 regardless of input dtype.
    y = jnp.dot(x_ref[...], w_ref[...], preferred_element_type=jnp.float32)        # (tn, n_out)

    # --- GroupNorm statistics: ONE pooling matmul on row-stacked [y ; y*y] -----------------
    stacked = jnp.concatenate([y, y * y], axis=0)                                    # (2*tn, n_out)
    stats = jnp.dot(stacked, gpool_ref[...], preferred_element_type=jnp.float32)     # (2*tn, G)
    mean_g = stats[:tn]                                                              # (tn, G)
    msq_g = stats[tn:]                                                               # (tn, G)
    # Single-pass variance; clamp at 0 to guard against catastrophic cancellation.
    var_g = jnp.maximum(msq_g - mean_g * mean_g, 0.0)
    inv_g = lax.rsqrt(var_g + eps)                                                   # EUP in group space

    # --- Broadcast back to channels: ONE matmul on stacked [inv ; mean*inv], gamma folded ---
    stacked_g = jnp.concatenate([inv_g, mean_g * inv_g], axis=0)                     # (2*tn, G)
    bc = jnp.dot(stacked_g, gbcg_ref[...], preferred_element_type=jnp.float32)       # (2*tn, n_out)
    scale = bc[:tn]   # gamma * inv          per (row, channel)
    shift = bc[tn:]   # gamma * mean * inv   per (row, channel)

    out = y * scale - shift + beta_ref[...]
    if act:
        out = jnp.maximum(out, 0.0)
    o_ref[...] = out.astype(o_ref.dtype)


def linear_gn_relu(x, w_t, gamma, beta, num_groups, *, eps=1e-5, act=True,
                   matmul_dtype=None, tile_n=None):
    """x: (N, n_in), w_t: (n_in, n_out) (transposed PyTorch weight), gamma/beta: (n_out,).

    matmul_dtype: optionally cast x / w_t (e.g. jnp.bfloat16) for the MXU; stats stay f32.
    tile_n:       batch tile size (rounded up to a multiple of 8); default min(512, N rounded).
    Returns (N, n_out) in x.dtype.
    """
    N, n_in = x.shape
    n_out = w_t.shape[1]
    assert n_out % num_groups == 0
    group_size = n_out // num_groups
    out_dtype = x.dtype

    # Group pooling matrix (n_out, G) with 1/group_size entries, and gamma-folded
    # broadcast matrix (G, n_out).  Tiny, static, built once in plain JAX.
    ch = jnp.arange(n_out)
    grp = ch // group_size
    onehot = (grp[:, None] == jnp.arange(num_groups)[None, :]).astype(jnp.float32)   # (n_out, G)
    gpool = onehot / float(group_size)                                               # (n_out, G)
    gbcast_gamma = onehot.T * gamma.astype(jnp.float32)[None, :]                     # (G, n_out)
    beta2 = beta.reshape(1, n_out).astype(jnp.float32)

    x_mm = x if matmul_dtype is None else x.astype(matmul_dtype)
    w_mm = w_t if matmul_dtype is None else w_t.astype(matmul_dtype)

    # Batch tiling: multiple of 8 (sublane), capped at 512 rows per tile.
    if tile_n is None:
        tile_n = min(512, _round_up(max(N, 1), 8))
    tile_n = max(8, _round_up(tile_n, 8))
    n_pad = _round_up(max(N, 1), tile_n)
    if n_pad != N:
        x_mm = jnp.pad(x_mm, ((0, n_pad - N), (0, 0)))
    n_tiles = n_pad // tile_n

    kernel = functools.partial(_linear_gn_relu_kernel, eps=eps, act=act)

    out = pl.pallas_call(
        kernel,
        out_shape=jax.ShapeDtypeStruct((n_pad, n_out), out_dtype),
        grid=(n_tiles,),
        in_specs=[
            pl.BlockSpec((tile_n, n_in), lambda i: (i, 0)),        # x tile (pipelined)
            pl.BlockSpec((n_in, n_out), lambda i: (0, 0)),         # weight, resident
            pl.BlockSpec((n_out, num_groups), lambda i: (0, 0)),   # group pooling, resident
            pl.BlockSpec((num_groups, n_out), lambda i: (0, 0)),   # gamma-folded broadcast, resident
            pl.BlockSpec((1, n_out), lambda i: (0, 0)),            # beta, resident
        ],
        out_specs=pl.BlockSpec((tile_n, n_out), lambda i: (i, 0)),
        compiler_params=pltpu.CompilerParams(
            dimension_semantics=("parallel",)),                     # megacore sharding on v7x
    )(x_mm, w_mm, gpool, gbcast_gamma, beta2)

    return out[:N]


def _reference(x, w_t, gamma, beta, num_groups, eps=1e-5, act=True):
    # Pure-JAX reference of Linear(bias=False) -> GroupNorm -> ReLU.
    y = x.astype(jnp.float32) @ w_t.astype(jnp.float32)            # (N, n_out)
    N, n_out = y.shape
    g = y.reshape(N, num_groups, n_out // num_groups)
    mean = g.mean(axis=-1, keepdims=True)
    var = g.var(axis=-1, keepdims=True)
    g = (g - mean) / jnp.sqrt(var + eps)
    y = g.reshape(N, n_out) * gamma[None, :] + beta[None, :]
    if act:
        y = jnp.maximum(y, 0.0)
    return y


if __name__ == "__main__":
    # Module config: Linear(n_in=32, n_out=128, norm='GN', ng=32, act=True)
    n_in, n_out, ng = 32, 128, 32
    num_groups = math.gcd(ng, n_out)   # = 32, group size 4

    key = jax.random.PRNGKey(0)
    kx, kw, kg, kb = jax.random.split(key, 4)

    # Deterministic init mimicking nn.Linear's kaiming-uniform bound (+-1/sqrt(n_in)).
    bound = 1.0 / math.sqrt(n_in)
    w = jax.random.uniform(kw, (n_out, n_in), minval=-bound, maxval=bound,
                           dtype=jnp.float32)       # PyTorch weight layout (n_out, n_in)
    w_t = w.T                                       # (n_in, n_out) for the kernel
    gamma = 1.0 + 0.1 * jax.random.normal(kg, (n_out,), dtype=jnp.float32)
    beta = 0.1 * jax.random.normal(kb, (n_out,), dtype=jnp.float32)

    # --- Test 1: default path (f32 matmul), single tile -------------------------------------
    N = 8
    x = jax.random.normal(kx, (N, n_in), dtype=jnp.float32)
    out = jax.block_until_ready(linear_gn_relu(x, w_t, gamma, beta, num_groups, act=True))
    ref = _reference(x, w_t, gamma, beta, num_groups, act=True)
    assert out.shape == (N, n_out)
    assert jnp.allclose(out, ref, atol=1e-4, rtol=1e-4), "f32 mismatch vs reference"

    # --- Test 2: multi-tile grid with batch padding (exercises N tiling / pipelining) --------
    N2 = 20
    x2 = jax.random.normal(kx, (N2, n_in), dtype=jnp.float32)
    out2 = jax.block_until_ready(
        linear_gn_relu(x2, w_t, gamma, beta, num_groups, act=True, tile_n=8))
    ref2 = _reference(x2, w_t, gamma, beta, num_groups, act=True)
    assert out2.shape == (N2, n_out)
    assert jnp.allclose(out2, ref2, atol=1e-4, rtol=1e-4), "tiled mismatch vs reference"

    # --- Test 3: bf16 MXU inputs (v6e/v7x fast path), f32 stats ------------------------------
    out3 = jax.block_until_ready(
        linear_gn_relu(x, w_t, gamma, beta, num_groups, act=True,
                       matmul_dtype=jnp.bfloat16))
    assert out3.shape == (N, n_out)
    assert jnp.allclose(out3, ref, atol=5e-2, rtol=5e-2), "bf16 mismatch vs reference"

    print("KERNEL_OK")
</pallas_src>

<mosaic_0001>
module attributes {stable_mosaic.version = 11 : i64} {
  func.func @_linear_gn_relu_kernel(%arg0: i32, %arg1: memref<8x32xf32, #tpu.memory_space<vmem>>, %arg2: memref<32x128xf32, #tpu.memory_space<vmem>>, %arg3: memref<128x32xf32, #tpu.memory_space<vmem>>, %arg4: memref<32x128xf32, #tpu.memory_space<vmem>>, %arg5: memref<1x128xf32, #tpu.memory_space<vmem>>, %arg6: memref<8x128xf32, #tpu.memory_space<vmem>>) attributes {dimension_semantics = [#tpu.dimension_semantics<parallel>], iteration_bounds = array<i64: 1>, scalar_prefetch = 0 : i64, scratch_operands = 0 : i64, tpu.core_type = #tpu.core_type<tc>, window_params = [{transform_indices = @transform_0, window_bounds = array<i64: 8, 32>}, {pipeline_mode = #tpu.pipeline_mode<synchronous>, transform_indices = @transform_1, window_bounds = array<i64: 32, 128>}, {pipeline_mode = #tpu.pipeline_mode<synchronous>, transform_indices = @transform_2, window_bounds = array<i64: 128, 32>}, {pipeline_mode = #tpu.pipeline_mode<synchronous>, transform_indices = @transform_3, window_bounds = array<i64: 32, 128>}, {pipeline_mode = #tpu.pipeline_mode<synchronous>, transform_indices = @transform_4, window_bounds = array<i64: 1, 128>}, {transform_indices = @transform_5, window_bounds = array<i64: 8, 128>}]} {
    %c0 = arith.constant 0 : index
    %c0_0 = arith.constant 0 : index
    %0 = vector.load %arg1[%c0, %c0_0] : memref<8x32xf32, #tpu.memory_space<vmem>>, vector<8x32xf32>
    %c0_1 = arith.constant 0 : index
    %c0_2 = arith.constant 0 : index
    %1 = vector.load %arg2[%c0_1, %c0_2] : memref<32x128xf32, #tpu.memory_space<vmem>>, vector<32x128xf32>
    %cst = arith.constant dense<0.000000e+00> : vector<8x128xf32>
    %2 = tpu.matmul %0, %1, %cst {dimension_numbers = #tpu.dot_dimension_numbers<[1], [0], [0], [1], [0, 0, 1, 1], [], []>} : vector<8x32xf32>, vector<32x128xf32>, vector<8x128xf32> -> vector<8x128xf32>
    %3 = arith.mulf %2, %2 : vector<8x128xf32>
    %4 = tpu.concatenate %2, %3 in 0 : vector<8x128xf32>, vector<8x128xf32> -> vector<16x128xf32>
    %c0_3 = arith.constant 0 : index
    %c0_4 = arith.constant 0 : index
    %5 = vector.load %arg3[%c0_3, %c0_4] : memref<128x32xf32, #tpu.memory_space<vmem>>, vector<128x32xf32>
    %cst_5 = arith.constant dense<0.000000e+00> : vector<16x32xf32>
    %6 = tpu.matmul %4, %5, %cst_5 {dimension_numbers = #tpu.dot_dimension_numbers<[1], [0], [0], [1], [0, 0, 1, 1], [], []>} : vector<16x128xf32>, vector<128x32xf32>, vector<16x32xf32> -> vector<16x32xf32>
    %7 = vector.extract_strided_slice %6 {offsets = [0, 0], sizes = [8, 32], strides = [1, 1]} : vector<16x32xf32> to vector<8x32xf32>
    %8 = vector.extract_strided_slice %6 {offsets = [8, 0], sizes = [8, 32], strides = [1, 1]} : vector<16x32xf32> to vector<8x32xf32>
    %9 = arith.mulf %7, %7 : vector<8x32xf32>
    %10 = arith.subf %8, %9 : vector<8x32xf32>
    %cst_6 = arith.constant 0.000000e+00 : f32
    %11 = vector.broadcast %cst_6 : f32 to vector<8x32xf32>
    %12 = arith.maximumf %10, %11 : vector<8x32xf32>
    %cst_7 = arith.constant 9.99999974E-6 : f32
    %13 = vector.broadcast %cst_7 : f32 to vector<8x32xf32>
    %14 = arith.addf %12, %13 : vector<8x32xf32>
    %15 = math.rsqrt %14 : vector<8x32xf32>
    %16 = arith.mulf %7, %15 : vector<8x32xf32>
    %17 = tpu.concatenate %15, %16 in 0 : vector<8x32xf32>, vector<8x32xf32> -> vector<16x32xf32>
    %c0_8 = arith.constant 0 : index
    %c0_9 = arith.constant 0 : index
    %18 = vector.load %arg4[%c0_8, %c0_9] : memref<32x128xf32, #tpu.memory_space<vmem>>, vector<32x128xf32>
    %cst_10 = arith.constant dense<0.000000e+00> : vector<16x128xf32>
    %19 = tpu.matmul %17, %18, %cst_10 {dimension_numbers = #tpu.dot_dimension_numbers<[1], [0], [0], [1], [0, 0, 1, 1], [], []>} : vector<16x32xf32>, vector<32x128xf32>, vector<16x128xf32> -> vector<16x128xf32>
    %20 = vector.extract_strided_slice %19 {offsets = [0, 0], sizes = [8, 128], strides = [1, 1]} : vector<16x128xf32> to vector<8x128xf32>
    %21 = vector.extract_strided_slice %19 {offsets = [8, 0], sizes = [8, 128], strides = [1, 1]} : vector<16x128xf32> to vector<8x128xf32>
    %22 = arith.mulf %2, %20 : vector<8x128xf32>
    %23 = arith.subf %22, %21 : vector<8x128xf32>
    %c0_11 = arith.constant 0 : index
    %c0_12 = arith.constant 0 : index
    %24 = vector.load %arg5[%c0_11, %c0_12] : memref<1x128xf32, #tpu.memory_space<vmem>>, vector<1x128xf32>
    %25 = vector.broadcast %24 : vector<1x128xf32> to vector<8x128xf32>
    %26 = arith.addf %23, %25 : vector<8x128xf32>
    %cst_13 = arith.constant 0.000000e+00 : f32
    %27 = vector.broadcast %cst_13 : f32 to vector<8x128xf32>
    %28 = arith.maximumf %26, %27 : vector<8x128xf32>
    %c0_14 = arith.constant 0 : index
    %c0_15 = arith.constant 0 : index
    %29 = vector.load %arg6[%c0_14, %c0_15] : memref<8x128xf32, #tpu.memory_space<vmem>>, vector<8x128xf32>
    tpu.vector_store %arg6[%c0_14, %c0_15], %28 {strides = array<i32>} : memref<8x128xf32, #tpu.memory_space<vmem>>, vector<8x128xf32>,
    return
  }
  func.func @transform_0(%arg0: i32) -> (i32, i32) {
    %c0_i32 = arith.constant 0 : i32
    %c0_i32_0 = arith.constant 0 : i32
    return %arg0, %c0_i32 : i32, i32
  }
  func.func @transform_1(%arg0: i32) -> (i32, i32) {
    %c0_i32 = arith.constant 0 : i32
    %c0_i32_0 = arith.constant 0 : i32
    %c0_i32_1 = arith.constant 0 : i32
    return %c0_i32, %c0_i32_0 : i32, i32
  }
  func.func @transform_2(%arg0: i32) -> (i32, i32) {
    %c0_i32 = arith.constant 0 : i32
    %c0_i32_0 = arith.constant 0 : i32
    %c0_i32_1 = arith.constant 0 : i32
    return %c0_i32, %c0_i32_0 : i32, i32
  }
  func.func @transform_3(%arg0: i32) -> (i32, i32) {
    %c0_i32 = arith.constant 0 : i32
    %c0_i32_0 = arith.constant 0 : i32
    %c0_i32_1 = arith.constant 0 : i32
    return %c0_i32, %c0_i32_0 : i32, i32
  }
  func.func @transform_4(%arg0: i32) -> (i32, i32) {
    %c0_i32 = arith.constant 0 : i32
    %c0_i32_0 = arith.constant 0 : i32
    %c0_i32_1 = arith.constant 0 : i32
    return %c0_i32, %c0_i32_0 : i32, i32
  }
  func.func @transform_5(%arg0: i32) -> (i32, i32) {
    %c0_i32 = arith.constant 0 : i32
    %c0_i32_0 = arith.constant 0 : i32
    return %arg0, %c0_i32 : i32, i32
  }
}

</mosaic_0001>

<llo_original>
// kernel: tpu_custom_call.1
$region0: #{tpu_custom_call.1}
  #allocation0 [shape = 'u32[]', space=smem, size = 0x4, offset = 0x4, fixed_abs, tag = 'smem constant byte address 0x4 - core index']
  #allocation1 [shape = 'u32[72,128]{1,0:T(1,128)}', space=vmem, size = 0x9000, scoped, tag = 'internal scratch']
  %s0 = inlined_call_operand.vmem [shape: f32[8,32], index: 0, kind: input, shape index: {}]
  %s1 = inlined_call_operand.vmem [shape: f32[32,128], index: 1, kind: input, shape index: {}]
  %s2 = inlined_call_operand.vmem [shape: f32[128,32], index: 2, kind: input, shape index: {}]
  %s3 = inlined_call_operand.vmem [shape: f32[32,128], index: 3, kind: input, shape index: {}]
  %s4 = inlined_call_operand.vmem [shape: f32[1,128], index: 4, kind: input, shape index: {}]
  %s5 = inlined_call_operand.hbm [shape: f32[8,128], index: 5, kind: output, shape index: {}]
  %s6 = sld [smem:[#allocation0]]
  $region30: #{tpu_custom_call.1} parent=0
    _
  %s8 = ssub.s32 1, %s6
  %s9 = scalar_select 0, %s8, %s6
  $region1: #{tpu_custom_call.1} parent=0
    #allocation2 [shape = 'u8[4096]{0}', space=vmem, size = 0x1000, scoped, tag = 'output window, operand 0, single buffered']
    #allocation3 [shape = 's32[1]{0}', space=sflag, size = 0x4, scoped, tag = 'scoped memory for tpu_custom_call.1']
    %10 = vsyncpa [#allocation3], 0
    // Predicated region
    $region2: #{tpu_custom_call.1} parent=1 // pred_check
      _
    $region3: #{tpu_custom_call.1} parent=1 // pred_check_branch
      %12 = sbr.rel (0) target = $region5
    $region4: #{tpu_custom_call.1} parent=1 // pred_region
      _
    $region5: #{tpu_custom_call.1} parent=1 // pred_fallthru
      _
    // Predicated region
    $region6: #{tpu_custom_call.1} parent=1 // pred_check
      _
    $region7: #{tpu_custom_call.1} parent=1 // pred_check_branch
      %14 = sbr.rel (0) target = $region9
    $region8: #{tpu_custom_call.1} parent=1 // pred_region
      _
    $region9: #{tpu_custom_call.1} parent=1 // pred_fallthru
      _
    // Predicated region
    $region10: #{tpu_custom_call.1} parent=1 // pred_check
      _
    $region11: #{tpu_custom_call.1} parent=1 // pred_check_branch
      %16 = sbr.rel (0) target = $region13
    $region12: #{tpu_custom_call.1} parent=1 // pred_region
      _
    $region13: #{tpu_custom_call.1} parent=1 // pred_fallthru
      _
    // Predicated region
    $region14: #{tpu_custom_call.1} parent=1 // pred_check
      _
    $region15: #{tpu_custom_call.1} parent=1 // pred_check_branch
      %18 = sbr.rel (0) target = $region17
    $region16: #{tpu_custom_call.1} parent=1 // pred_region
      _
    $region17: #{tpu_custom_call.1} parent=1 // pred_fallthru
      _
    // Predicated region
    $region18: #{tpu_custom_call.1} parent=1 // pred_check
      _
    $region19: #{tpu_custom_call.1} parent=1 // pred_check_branch
      %20 = sbr.rel (0) target = $region21
    $region20: #{tpu_custom_call.1} parent=1 // pred_region
      _
    $region21: #{tpu_custom_call.1} parent=1 // pred_fallthru
      _
    %v21 = vld [vmem:[%s0] sm:$0xff]
    %v22 = vld [vmem:[%s1] sm:$0xff]
    %v23 = vld [vmem:[%s1 + $0x8] sm:$0xff]
    %v24 = vld [vmem:[%s1 + $0x10] sm:$0xff]
    %v25 = vld [vmem:[%s1 + $0x18] sm:$0xff]
    %vm26 = vcmask 261120
    %v28 = vsel %vm26, %v21, 0
    %30 = vmatpush.msra.mxu0 0.0
    %31 = vmatpush.msra.mxu0 0.0
    %32 = vmatpush.msra.mxu0 0.0
    %33 = vmatpush.msra.mxu0 0.0
    %34 = vmatpush.msra.mxu0 0.0
    %35 = vmatpush.msra.mxu0 0.0
    %36 = vmatpush.msra.mxu0 0.0
    %37 = vmatpush.msra.mxu0 0.0
    %38 = vmatpush.msra.mxu0 0.0
    %39 = vmatpush.msra.mxu0 0.0
    %40 = vmatpush.msra.mxu0 0.0
    %41 = vmatpush.msra.mxu0 0.0
    %42 = vmatpush.msra.mxu0 %v25
    %43 = vmatpush.msra.mxu0 %v24
    %44 = vmatpush.msra.mxu0 %v23
    %45 = vmatpush.msra.mxu0 %v22
    %46 = vmatmul.f32.gmra.mxu0 %v28
    %v47 = vpop.f32.mrf.mxu0
    %v48 = vadd.f32 0.0, %v47
    %49 = vdwg.mxu0
    %v50 = vmul.f32 %v48, %v48
    %v51 = vld [vmem:[%s2] sm:$0xff]
    %v52 = vld [vmem:[%s2 + $0x8] sm:$0xff]
    %v53 = vld [vmem:[%s2 + $0x10] sm:$0xff]
    %v54 = vld [vmem:[%s2 + $0x18] sm:$0xff]
    %v55 = vld [vmem:[%s2 + $0x20] sm:$0xff]
    %v56 = vld [vmem:[%s2 + $0x28] sm:$0xff]
    %v57 = vld [vmem:[%s2 + $0x30] sm:$0xff]
    %v58 = vld [vmem:[%s2 + $0x38] sm:$0xff]
    %v59 = vld [vmem:[%s2 + $0x40] sm:$0xff]
    %v60 = vld [vmem:[%s2 + $0x48] sm:$0xff]
    %v61 = vld [vmem:[%s2 + $0x50] sm:$0xff]
    %v62 = vld [vmem:[%s2 + $0x58] sm:$0xff]
    %v63 = vld [vmem:[%s2 + $0x60] sm:$0xff]
    %v64 = vld [vmem:[%s2 + $0x68] sm:$0xff]
    %v65 = vld [vmem:[%s2 + $0x70] sm:$0xff]
    %v66 = vld [vmem:[%s2 + $0x78] sm:$0xff]
    %67 = vmatpush.msra.mxu0 %v66
    %68 = vmatpush.msra.mxu0 %v65
    %69 = vmatpush.msra.mxu0 %v64
    %70 = vmatpush.msra.mxu0 %v63
    %71 = vmatpush.msra.mxu0 %v62
    %72 = vmatpush.msra.mxu0 %v61
    %73 = vmatpush.msra.mxu0 %v60
    %74 = vmatpush.msra.mxu0 %v59
    %75 = vmatpush.msra.mxu0 %v58
    %76 = vmatpush.msra.mxu0 %v57
    %77 = vmatpush.msra.mxu0 %v56
    %78 = vmatpush.msra.mxu0 %v55
    %79 = vmatpush.msra.mxu0 %v54
    %80 = vmatpush.msra.mxu0 %v53
    %81 = vmatpush.msra.mxu0 %v52
    %82 = vmatpush.msra.mxu0 %v51
    %83 = vmatmul.f32.gmra.mxu0 %v48
    %v84 = vpop.f32.mrf.mxu0
    %v85 = vadd.f32 0.0, %v84
    %86 = vmatmul.f32.gmra.mxu0 %v50
    %v87 = vpop.f32.mrf.mxu0
    %v88 = vadd.f32 0.0, %v87
    %89 = vdwg.mxu0
    %v90 = vmul.f32 %v85, %v85
    %v91 = vsub.f32 %v88, %v90
    %v92 = vmax.f32 %v91, 0.0
    %v93 = vadd.f32 %v92, 1e-05
    %v94 = vrsqrt.pop %v93
    %v95 = vmul.f32 %v94, %v93
    %v96 = vmul.f32 %v95, %v94
    %v97 = vmul.f32 0.5, %v96
    %v98 = vsub.f32 1.5, %v97
    %v99 = vmul.f32 %v94, %v98
    %vm100 = vweird.f32 %v93
    %vm101 = vweird.f32 %v94
    %vm102 = vmor %vm100, %vm101
    %v103 = vsel %vm102, %v94, %v99
    %v104 = vmul.f32 %v85, %v103
    %v105 = vld [vmem:[%s3] sm:$0xff]
    %v106 = vld [vmem:[%s3 + $0x8] sm:$0xff]
    %v107 = vld [vmem:[%s3 + $0x10] sm:$0xff]
    %v108 = vld [vmem:[%s3 + $0x18] sm:$0xff]
    %v110 = vsel %vm26, %v103, 0
    %v113 = vsel %vm26, %v104, 0
    %115 = vmatpush.msra.mxu0 0.0
    %116 = vmatpush.msra.mxu0 0.0
    %117 = vmatpush.msra.mxu0 0.0
    %118 = vmatpush.msra.mxu0 0.0
    %119 = vmatpush.msra.mxu0 0.0
    %120 = vmatpush.msra.mxu0 0.0
    %121 = vmatpush.msra.mxu0 0.0
    %122 = vmatpush.msra.mxu0 0.0
    %123 = vmatpush.msra.mxu0 0.0
    %124 = vmatpush.msra.mxu0 0.0
    %125 = vmatpush.msra.mxu0 0.0
    %126 = vmatpush.msra.mxu0 0.0
    %127 = vmatpush.msra.mxu0 %v108
    %128 = vmatpush.msra.mxu0 %v107
    %129 = vmatpush.msra.mxu0 %v106
    %130 = vmatpush.msra.mxu0 %v105
    %131 = vmatmul.f32.gmra.mxu0 %v110
    %v132 = vpop.f32.mrf.mxu0
    %v133 = vadd.f32 0.0, %v132
    %134 = vmatmul.f32.gmra.mxu0 %v113
    %v135 = vpop.f32.mrf.mxu0
    %v136 = vadd.f32 0.0, %v135
    %137 = vdwg.mxu0
    %v138 = vmul.f32 %v48, %v133
    %v139 = vsub.f32 %v138, %v136
    %v140 = vld [vmem:[%s4] sm:$0x1]
    %v142 = vperm.slane %v140, 0
    %v144 = vadd.f32 %v139, %v142
    %v145 = vmax.f32 %v144, 0.0
    %146 = vst [vmem:[#allocation2] sm:$0xff] %v145
    // Predicated region
    $region22: #{tpu_custom_call.1} parent=1 // pred_check
      _
    $region23: #{tpu_custom_call.1} parent=1 // pred_check_branch
      %148 = sbr.rel (0) target = $region25
    $region24: #{tpu_custom_call.1} parent=1 // pred_region
      %150 = vsyncadd [#allocation3], 0
      %s152 = sshll.u32 [#allocation2], 4
      %s153 = int_to_ptr.vmem [resolvable:$true] %s152
      %s154 = sshll.u32 %s5, 4
      %s155 = int_to_ptr.hbm [resolvable:$true] %s154
      %157 = dma.vmem_to_hbm [thread:$0]  %s153, 128, %s155, [#allocation3]
    $region25: #{tpu_custom_call.1} parent=1 // pred_fallthru
      _
    // Predicated region
    $region26: #{tpu_custom_call.1} parent=1 // pred_check
      _
    $region27: #{tpu_custom_call.1} parent=1 // pred_check_branch
      %159 = sbr.rel (0) target = $region29
    $region28: #{tpu_custom_call.1} parent=1 // pred_region
      %161 = dma.done [#allocation3], 128
    $region29: #{tpu_custom_call.1} parent=1 // pred_fallthru
      _
    %162 = vsyncpa [#allocation3], 1

</llo_original>
